<compile_context>
chip_gen: v6e
topology: v6e:2x2x1
jax: 0.10.0
libtpu: 0.0.40
codegen_flags: <defaults>
</compile_context>

<pallas_src>
import functools

import jax
import jax.numpy as jnp
from jax.experimental import pallas as pl
from jax.experimental.pallas import tpu as pltpu


def _rope_kernel(pos_ref, efreq_ref, q_ref, k_ref, qo_ref, ko_ref,
                 cos_ref, sfwd_ref, sbwd_ref, *,
                 d_block, half, rot_dim, shift_fwd, shift_bwd, two_roll, n_pack):
    """Rotates one (1, Hb, Sb, W) tile of q and k.

    pos_ref   : (1, Sb, P)  f32 packed positions for this (b, s) tile.
    efreq_ref : (P, W)      f32 table, efreq[p, l] = inv_freq(l % D) if
                            l // D == p and (l % D) < rot_dim else 0.
    q/k/qo/ko : (1, Hb, Sb, W), W = P * d_block lanes (P packed seq rows).
    cos/sfwd/sbwd_ref : (Sb, W) f32 VMEM scratch, rebuilt once per (b, s)
                        tile (head axis is innermost + "arbitrary").
    """
    # ---- (re)build trig + mask tables only on the first head block ----------
    @pl.when(pl.program_id(2) == 0)
    def _build_tables():
        pos = pos_ref[0]                          # (Sb, P) f32
        efq = efreq_ref[...]                      # (P, W) f32
        # angle[s, l] = pos[s, l // D] * inv_freq(l % D); zero on non-rotary tail
        ang = pos[:, 0:1] * efq[0:1, :]           # (Sb, W)
        for p in range(1, n_pack):
            ang = ang + pos[:, p:p + 1] * efq[p:p + 1, :]
        cos = jnp.cos(ang)
        sin = jnp.sin(ang)
        lane = jax.lax.broadcasted_iota(jnp.int32, ang.shape, dimension=1)
        l_loc = lane % d_block                    # lane index inside its head_dim block
        cos_ref[...] = cos                        # tail lanes: ang == 0 -> cos == 1
        if two_roll:
            # partner x[j+half] for first rotary half; partner x[j-half] for second.
            sfwd_ref[...] = jnp.where(l_loc < half, -sin, 0.0)
            sbwd_ref[...] = jnp.where((l_loc >= half) & (l_loc < rot_dim), sin, 0.0)
        else:
            # unpacked fully-rotary case: single roll, sign-flipped sin
            sfwd_ref[...] = jnp.where(l_loc < half, -sin, sin)

    cos = cos_ref[...]
    sfwd = sfwd_ref[...]
    if two_roll:
        sbwd = sbwd_ref[...]

        def rotate(x):
            xf = x.astype(jnp.float32)
            return (xf * cos
                    + pltpu.roll(xf, shift_fwd, axis=xf.ndim - 1) * sfwd
                    + pltpu.roll(xf, shift_bwd, axis=xf.ndim - 1) * sbwd)
    else:
        def rotate(x):
            xf = x.astype(jnp.float32)
            return xf * cos + pltpu.roll(xf, shift_fwd, axis=xf.ndim - 1) * sfwd

    # Single unmasked full-width store per tensor.
    qo_ref[0] = rotate(q_ref[0]).astype(qo_ref.dtype)
    ko_ref[0] = rotate(k_ref[0]).astype(ko_ref.dtype)


def _largest_divisor_leq(n, cap):
    cap = max(1, min(n, cap))
    for d in range(cap, 0, -1):
        if n % d == 0:
            return d
    return 1


def _sublane_multiple(itemsize):
    return {4: 8, 2: 16, 1: 32}.get(itemsize, 8)


def _choose_block(batch, num_heads, s_packed, width, itemsize, target_bytes):
    """Pick (Hb, Sb): heads first (amortize pos/trig), then a seq tile."""
    sub = _sublane_multiple(itemsize)
    row_bytes = width * itemsize
    max_rows = max(1, target_bytes // row_bytes)      # rows (= Hb * Sb) per q tile

    min_sb = min(s_packed, sub)
    hb = _largest_divisor_leq(num_heads, max(1, max_rows // min_sb))

    sb_budget = max(min_sb, max_rows // hb)
    candidates = [d for d in range(sub, s_packed + 1, sub) if s_packed % d == 0]
    candidates.append(s_packed)
    fitting = [d for d in candidates if d <= sb_budget]
    if fitting:
        sb = max(fitting)
    else:
        # No dividing tile fits the budget (awkward s_packed): use a ragged
        # (cdiv) seq tile instead of blowing VMEM with the full sequence.
        sb = max(min_sb, (sb_budget // sub) * sub)

    # Megacore: ensure >= 2 parallel (b, s) steps so a 2-TC chip can shard work.
    if batch * pl.cdiv(s_packed, sb) < 2:
        smaller = [d for d in candidates if d < sb]
        if smaller:
            sb = max(smaller)
    return hb, sb


def rotary_positional_embedding(q, k, position_ids, *, dim, base=10000,
                                block_target_bytes=2 << 20,
                                vmem_limit_bytes=48 * 1024 * 1024):
    """JAX wrapper mirroring RotaryPositionalEmbedding.forward(q, k, position_ids)."""
    B, H, S, D = q.shape
    assert k.shape == q.shape
    assert position_ids.shape == (B, S)
    assert dim % 2 == 0, "rotary dim must be even"
    assert 2 <= dim <= D, "rotary dim must satisfy 2 <= dim <= head_dim"
    half = dim // 2

    # ---- lane packing: fold P seq rows into one 128-lane row when D < 128 ----
    if D < 128 and 128 % D == 0:
        P = 128 // D
    else:
        # TODO(synk): D < 128 that does not divide 128 (e.g. 96) falls back to
        #             W = D (masked stores); padding D costs a full extra HBM pass.
        P = 1

    # Pad seq so packing divides (rare path; one extra pad/slice pass).
    S_pad = -(-S // P) * P
    if S_pad != S:
        pad = S_pad - S
        q = jnp.pad(q, ((0, 0), (0, 0), (0, pad), (0, 0)))
        k = jnp.pad(k, ((0, 0), (0, 0), (0, pad), (0, 0)))
        position_ids = jnp.pad(position_ids, ((0, 0), (0, pad)))

    W = P * D
    S_p = S_pad // P

    # ---- tiny side inputs: packed positions + frequency/expansion table ------
    pos_packed = position_ids.reshape(B, S_p, P).astype(jnp.float32)        # (B, S_p, P)
    inv_freq = 1.0 / (base ** (jnp.arange(0, dim, 2, dtype=jnp.float32) / dim))   # (half,)
    freq_lane = jnp.concatenate(
        [inv_freq, inv_freq, jnp.zeros((D - dim,), jnp.float32)])           # (D,)
    eye = jnp.eye(P, dtype=jnp.float32)
    efreq = (eye[:, :, None] * freq_lane[None, None, :]).reshape(P, W)      # (P, W)

    q_p = q.reshape(B, H, S_p, W)    # contiguous -> free reshape
    k_p = k.reshape(B, H, S_p, W)

    itemsize = jnp.dtype(q.dtype).itemsize
    Hb, Sb = _choose_block(B, H, S_p, W, itemsize, block_target_bytes)

    grid = (B, pl.cdiv(S_p, Sb), H // Hb)         # heads innermost -> pos/trig reuse
    pos_spec = pl.BlockSpec((1, Sb, P), lambda b, s, h: (b, s, 0))
    efq_spec = pl.BlockSpec((P, W), lambda b, s, h: (0, 0))
    qk_spec = pl.BlockSpec((1, Hb, Sb, W), lambda b, s, h: (b, h, s, 0))

    kernel = functools.partial(
        _rope_kernel, d_block=D, half=half, rot_dim=dim,
        shift_fwd=(W - half) % W, shift_bwd=half,
        two_roll=(W != dim), n_pack=P)

    cost = pl.CostEstimate(
        flops=int(10 * B * H * S_p * W),
        transcendentals=int(2 * B * S_p * W),
        bytes_accessed=int(4 * B * H * S_p * W * itemsize
                           + pos_packed.size * 4 + efreq.size * 4))

    q_out, k_out = pl.pallas_call(
        kernel,
        out_shape=(
            jax.ShapeDtypeStruct(q_p.shape, q.dtype),
            jax.ShapeDtypeStruct(k_p.shape, k.dtype),
        ),
        grid=grid,
        in_specs=[pos_spec, efq_spec, qk_spec, qk_spec],
        out_specs=(qk_spec, qk_spec),
        scratch_shapes=[pltpu.VMEM((Sb, W), jnp.float32),   # cos
                        pltpu.VMEM((Sb, W), jnp.float32),   # signed sin (fwd partner)
                        pltpu.VMEM((Sb, W), jnp.float32)],  # signed sin (bwd partner)
        input_output_aliases={2: 0, 3: 1},        # q -> q_out, k -> k_out
        compiler_params=pltpu.CompilerParams(
            dimension_semantics=("parallel", "parallel", "arbitrary"),
            vmem_limit_bytes=vmem_limit_bytes,
        ),
        cost_estimate=cost,
    )(pos_packed, efreq, q_p, k_p)

    q_out = q_out.reshape(B, H, S_pad, D)
    k_out = k_out.reshape(B, H, S_pad, D)
    if S_pad != S:
        q_out = q_out[:, :, :S, :]
        k_out = k_out[:, :, :S, :]
    return q_out, k_out


def _reference(q, k, position_ids, *, dim, base=10000):
    """Pure-JAX reference of the intended forward semantics (split-half RoPE)."""
    half = dim // 2
    inv_freq = 1.0 / (base ** (jnp.arange(0, dim, 2, dtype=jnp.float32) / dim))
    freqs = position_ids.astype(jnp.float32)[..., None] * inv_freq   # (B, S, half)
    cos = jnp.cos(freqs)[:, None, :, :]                              # broadcast over heads
    sin = jnp.sin(freqs)[:, None, :, :]

    def apply(x):
        xf = x.astype(jnp.float32)
        x1 = xf[..., :half]
        x2 = xf[..., half:dim]
        r1 = cos * x1 - sin * x2
        r2 = sin * x1 + cos * x2
        rotated = jnp.concatenate([r1, r2], axis=-1)
        if x.shape[-1] > dim:
            rotated = jnp.concatenate([rotated, xf[..., dim:]], axis=-1)
        return rotated

    return apply(q), apply(k)


if __name__ == "__main__":
    root_key = jax.random.PRNGKey(0)
    case_keys = jax.random.split(root_key, 5)

    def run_case(key, B, H, S, D, rot_dim, dtype=jnp.float32, tol=1e-4, **kw):
        kq, kk = jax.random.split(key)
        q = jax.random.normal(kq, (B, H, S, D), dtype=jnp.float32).astype(dtype)
        k = jax.random.normal(kk, (B, H, S, D), dtype=jnp.float32).astype(dtype)
        position_ids = jnp.broadcast_to(jnp.arange(S, dtype=jnp.int32), (B, S))

        q_ref, k_ref = _reference(q, k, position_ids, dim=rot_dim)

        fn = jax.jit(functools.partial(rotary_positional_embedding, dim=rot_dim, **kw))
        q_out, k_out = fn(q, k, position_ids)
        jax.block_until_ready((q_out, k_out))

        assert q_out.shape == (B, H, S, D) and q_out.dtype == dtype
        assert jnp.allclose(q_out.astype(jnp.float32), q_ref, atol=tol, rtol=tol), "q mismatch"
        assert jnp.allclose(k_out.astype(jnp.float32), k_ref, atol=tol, rtol=tol), "k mismatch"

    # 1) packed path (D=64 -> 2 seq rows folded into 128 lanes), fully rotary.
    run_case(case_keys[0], B=2, H=4, S=8, D=64, rot_dim=64)
    # 2) already lane-dense path (D=128), single-roll rotate.
    run_case(case_keys[1], B=1, H=2, S=8, D=128, rot_dim=128)
    # 3) partial rotary + multiple head blocks: exercises the cached trig tables
    #    (tiny block target forces Hb=1 so the head grid is > 1).
    run_case(case_keys[2], B=1, H=8, S=16, D=64, rot_dim=32,
             block_target_bytes=4096)
    # 4) seq length not divisible by the packing factor -> wrapper pads & strips.
    run_case(case_keys[3], B=1, H=2, S=7, D=64, rot_dim=64)
    # 5) bf16 activations (16-row sublane alignment path; math still in f32).
    run_case(case_keys[4], B=1, H=4, S=32, D=64, rot_dim=64,
             dtype=jnp.bfloat16, tol=5e-2)

    print("KERNEL_OK")
</pallas_src>

<mosaic_0001>
module attributes {stable_mosaic.version = 11 : i64} {
  func.func @_rope_kernel(%arg0: i32, %arg1: i32, %arg2: i32, %arg3: memref<1x4x2xf32, #tpu.memory_space<vmem>>, %arg4: memref<2x128xf32, #tpu.memory_space<vmem>>, %arg5: memref<1x4x4x128xf32, #tpu.memory_space<vmem>>, %arg6: memref<1x4x4x128xf32, #tpu.memory_space<vmem>>, %arg7: memref<1x4x4x128xf32, #tpu.memory_space<vmem>>, %arg8: memref<1x4x4x128xf32, #tpu.memory_space<vmem>>, %arg9: memref<4x128xf32, #tpu.memory_space<vmem>>, %arg10: memref<4x128xf32, #tpu.memory_space<vmem>>, %arg11: memref<4x128xf32, #tpu.memory_space<vmem>>) attributes {dimension_semantics = [#tpu.dimension_semantics<parallel>, #tpu.dimension_semantics<parallel>, #tpu.dimension_semantics<arbitrary>], iteration_bounds = array<i64: 2, 1, 1>, scalar_prefetch = 0 : i64, scratch_operands = 3 : i64, tpu.core_type = #tpu.core_type<tc>, window_params = [{transform_indices = @transform_0, window_bounds = array<i64: 1, 4, 2>}, {pipeline_mode = #tpu.pipeline_mode<synchronous>, transform_indices = @transform_1, window_bounds = array<i64: 2, 128>}, {transform_indices = @transform_2, window_bounds = array<i64: 1, 4, 4, 128>}, {transform_indices = @transform_3, window_bounds = array<i64: 1, 4, 4, 128>}, {transform_indices = @transform_4, window_bounds = array<i64: 1, 4, 4, 128>}, {transform_indices = @transform_5, window_bounds = array<i64: 1, 4, 4, 128>}]} {
    %c0_i32 = arith.constant 0 : i32
    %0 = arith.cmpi eq, %arg2, %c0_i32 : i32
    %1 = arith.extui %0 : i1 to i32
    %c0_i32_0 = arith.constant 0 : i32
    %2 = arith.cmpi ne, %1, %c0_i32_0 : i32
    scf.if %2 {
      %c0_24 = arith.constant 0 : index
      %c0_25 = arith.constant 0 : index
      %c0_26 = arith.constant 0 : index
      %42 = vector.load %arg3[%c0_24, %c0_25, %c0_26] : memref<1x4x2xf32, #tpu.memory_space<vmem>>, vector<1x4x2xf32>
      %43 = vector.shape_cast %42 : vector<1x4x2xf32> to vector<4x2xf32>
      %c0_27 = arith.constant 0 : index
      %c0_28 = arith.constant 0 : index
      %44 = vector.load %arg4[%c0_27, %c0_28] : memref<2x128xf32, #tpu.memory_space<vmem>>, vector<2x128xf32>
      %45 = vector.extract_strided_slice %43 {offsets = [0, 0], sizes = [4, 1], strides = [1, 1]} : vector<4x2xf32> to vector<4x1xf32>
      %46 = vector.extract_strided_slice %44 {offsets = [0, 0], sizes = [1, 128], strides = [1, 1]} : vector<2x128xf32> to vector<1x128xf32>
      %47 = vector.broadcast %45 : vector<4x1xf32> to vector<4x128xf32>
      %48 = vector.broadcast %46 : vector<1x128xf32> to vector<4x128xf32>
      %49 = arith.mulf %47, %48 : vector<4x128xf32>
      %50 = vector.extract_strided_slice %43 {offsets = [0, 1], sizes = [4, 1], strides = [1, 1]} : vector<4x2xf32> to vector<4x1xf32>
      %51 = vector.extract_strided_slice %44 {offsets = [1, 0], sizes = [1, 128], strides = [1, 1]} : vector<2x128xf32> to vector<1x128xf32>
      %52 = vector.broadcast %50 : vector<4x1xf32> to vector<4x128xf32>
      %53 = vector.broadcast %51 : vector<1x128xf32> to vector<4x128xf32>
      %54 = arith.mulf %52, %53 : vector<4x128xf32>
      %55 = arith.addf %49, %54 : vector<4x128xf32>
      %56 = math.cos %55 : vector<4x128xf32>
      %57 = math.sin %55 : vector<4x128xf32>
      %58 = tpu.iota {dimensions = array<i32: 1>} : vector<4x128xi32>
      %c64_i32 = arith.constant 64 : i32
      %c0_i32_29 = arith.constant 0 : i32
      %59 = arith.cmpi eq, %c64_i32, %c0_i32_29 : i32
      %c1_i32 = arith.constant 1 : i32
      %60 = arith.select %59, %c1_i32, %c64_i32 : i32
      %61 = vector.broadcast %60 : i32 to vector<4x128xi32>
      %62 = arith.remsi %58, %61 : vector<4x128xi32>
      %c0_i32_30 = arith.constant 0 : i32
      %63 = vector.broadcast %c0_i32_30 : i32 to vector<4x128xi32>
      %64 = arith.cmpi ne, %62, %63 : vector<4x128xi32>
      %c0_i32_31 = arith.constant 0 : i32
      %65 = vector.broadcast %c0_i32_31 : i32 to vector<4x128xi32>
      %66 = arith.cmpi slt, %62, %65 : vector<4x128xi32>
      %c0_i32_32 = arith.constant 0 : i32
      %67 = arith.cmpi slt, %60, %c0_i32_32 : i32
      %68 = vector.broadcast %67 : i1 to vector<4x128xi1>
      %69 = vector.broadcast %68 : vector<4x128xi1> to vector<4x128xi1>
      %70 = arith.xori %66, %69 : vector<4x128xi1>
      %71 = arith.andi %70, %64 : vector<4x128xi1>
      %72 = vector.broadcast %60 : i32 to vector<4x128xi32>
      %73 = arith.addi %62, %72 : vector<4x128xi32>
      %74 = arith.select %71, %73, %62 : vector<4x128xi1>, vector<4x128xi32>
      %c0_33 = arith.constant 0 : index
      %c0_34 = arith.constant 0 : index
      %75 = vector.load %arg9[%c0_33, %c0_34] : memref<4x128xf32, #tpu.memory_space<vmem>>, vector<4x128xf32>
      tpu.vector_store %arg9[%c0_33, %c0_34], %56 {strides = array<i32>} : memref<4x128xf32, #tpu.memory_space<vmem>>, vector<4x128xf32>,
      %c32_i32_35 = arith.constant 32 : i32
      %76 = vector.broadcast %c32_i32_35 : i32 to vector<4x128xi32>
      %77 = arith.cmpi slt, %74, %76 : vector<4x128xi32>
      %cst = arith.constant 0.000000e+00 : f32
      %78 = vector.broadcast %cst : f32 to vector<4x128xf32>
      %79 = arith.subf %78, %57 : vector<4x128xf32>
      %cst_36 = arith.constant 0.000000e+00 : f32
      %80 = vector.broadcast %cst_36 : f32 to vector<4x128xf32>
      %81 = arith.select %77, %79, %80 : vector<4x128xi1>, vector<4x128xf32>
      %c0_37 = arith.constant 0 : index
      %c0_38 = arith.constant 0 : index
      %82 = vector.load %arg10[%c0_37, %c0_38] : memref<4x128xf32, #tpu.memory_space<vmem>>, vector<4x128xf32>
      tpu.vector_store %arg10[%c0_37, %c0_38], %81 {strides = array<i32>} : memref<4x128xf32, #tpu.memory_space<vmem>>, vector<4x128xf32>,
      %c32_i32_39 = arith.constant 32 : i32
      %83 = vector.broadcast %c32_i32_39 : i32 to vector<4x128xi32>
      %84 = arith.cmpi sge, %74, %83 : vector<4x128xi32>
      %c64_i32_40 = arith.constant 64 : i32
      %85 = vector.broadcast %c64_i32_40 : i32 to vector<4x128xi32>
      %86 = arith.cmpi slt, %74, %85 : vector<4x128xi32>
      %87 = arith.andi %84, %86 : vector<4x128xi1>
      %cst_41 = arith.constant 0.000000e+00 : f32
      %88 = vector.broadcast %cst_41 : f32 to vector<4x128xf32>
      %89 = arith.select %87, %57, %88 : vector<4x128xi1>, vector<4x128xf32>
      %c0_42 = arith.constant 0 : index
      %c0_43 = arith.constant 0 : index
      %90 = vector.load %arg11[%c0_42, %c0_43] : memref<4x128xf32, #tpu.memory_space<vmem>>, vector<4x128xf32>
      tpu.vector_store %arg11[%c0_42, %c0_43], %89 {strides = array<i32>} : memref<4x128xf32, #tpu.memory_space<vmem>>, vector<4x128xf32>,
    } else {
    }
    %c0 = arith.constant 0 : index
    %c0_1 = arith.constant 0 : index
    %3 = vector.load %arg9[%c0, %c0_1] : memref<4x128xf32, #tpu.memory_space<vmem>>, vector<4x128xf32>
    %c0_2 = arith.constant 0 : index
    %c0_3 = arith.constant 0 : index
    %4 = vector.load %arg10[%c0_2, %c0_3] : memref<4x128xf32, #tpu.memory_space<vmem>>, vector<4x128xf32>
    %c0_4 = arith.constant 0 : index
    %c0_5 = arith.constant 0 : index
    %5 = vector.load %arg11[%c0_4, %c0_5] : memref<4x128xf32, #tpu.memory_space<vmem>>, vector<4x128xf32>
    %c0_6 = arith.constant 0 : index
    %c0_7 = arith.constant 0 : index
    %c0_8 = arith.constant 0 : index
    %c0_9 = arith.constant 0 : index
    %6 = vector.load %arg5[%c0_6, %c0_7, %c0_8, %c0_9] : memref<1x4x4x128xf32, #tpu.memory_space<vmem>>, vector<1x4x4x128xf32>
    %7 = vector.shape_cast %6 : vector<1x4x4x128xf32> to vector<4x4x128xf32>
    %8 = vector.shape_cast %3 : vector<4x128xf32> to vector<1x4x128xf32>
    %9 = vector.broadcast %8 : vector<1x4x128xf32> to vector<4x4x128xf32>
    %10 = arith.mulf %7, %9 : vector<4x4x128xf32>
    %c96_i32 = arith.constant 96 : i32
    %11 = tpu.dynamic_rotate %7 by %c96_i32 dim 2 : vector<4x4x128xf32>, i32 -> vector<4x4x128xf32>
    %12 = vector.shape_cast %4 : vector<4x128xf32> to vector<1x4x128xf32>
    %13 = vector.broadcast %12 : vector<1x4x128xf32> to vector<4x4x128xf32>
    %14 = arith.mulf %11, %13 : vector<4x4x128xf32>
    %15 = arith.addf %10, %14 : vector<4x4x128xf32>
    %c32_i32 = arith.constant 32 : i32
    %16 = tpu.dynamic_rotate %7 by %c32_i32 dim 2 : vector<4x4x128xf32>, i32 -> vector<4x4x128xf32>
    %17 = vector.shape_cast %5 : vector<4x128xf32> to vector<1x4x128xf32>
    %18 = vector.broadcast %17 : vector<1x4x128xf32> to vector<4x4x128xf32>
    %19 = arith.mulf %16, %18 : vector<4x4x128xf32>
    %20 = arith.addf %15, %19 : vector<4x4x128xf32>
    %c0_10 = arith.constant 0 : index
    %c0_11 = arith.constant 0 : index
    %c0_12 = arith.constant 0 : index
    %c0_13 = arith.constant 0 : index
    %21 = vector.load %arg7[%c0_10, %c0_11, %c0_12, %c0_13] : memref<1x4x4x128xf32, #tpu.memory_space<vmem>>, vector<1x4x4x128xf32>
    %22 = vector.shape_cast %21 : vector<1x4x4x128xf32> to vector<4x4x128xf32>
    %23 = vector.shape_cast %20 : vector<4x4x128xf32> to vector<1x4x4x128xf32>
    tpu.vector_store %arg7[%c0_10, %c0_11, %c0_12, %c0_13], %23 {strides = array<i32>} : memref<1x4x4x128xf32, #tpu.memory_space<vmem>>, vector<1x4x4x128xf32>,
    %c0_14 = arith.constant 0 : index
    %c0_15 = arith.constant 0 : index
    %c0_16 = arith.constant 0 : index
    %c0_17 = arith.constant 0 : index
    %24 = vector.load %arg6[%c0_14, %c0_15, %c0_16, %c0_17] : memref<1x4x4x128xf32, #tpu.memory_space<vmem>>, vector<1x4x4x128xf32>
    %25 = vector.shape_cast %24 : vector<1x4x4x128xf32> to vector<4x4x128xf32>
    %26 = vector.shape_cast %3 : vector<4x128xf32> to vector<1x4x128xf32>
    %27 = vector.broadcast %26 : vector<1x4x128xf32> to vector<4x4x128xf32>
    %28 = arith.mulf %25, %27 : vector<4x4x128xf32>
    %c96_i32_18 = arith.constant 96 : i32
    %29 = tpu.dynamic_rotate %25 by %c96_i32_18 dim 2 : vector<4x4x128xf32>, i32 -> vector<4x4x128xf32>
    %30 = vector.shape_cast %4 : vector<4x128xf32> to vector<1x4x128xf32>
    %31 = vector.broadcast %30 : vector<1x4x128xf32> to vector<4x4x128xf32>
    %32 = arith.mulf %29, %31 : vector<4x4x128xf32>
    %33 = arith.addf %28, %32 : vector<4x4x128xf32>
    %c32_i32_19 = arith.constant 32 : i32
    %34 = tpu.dynamic_rotate %25 by %c32_i32_19 dim 2 : vector<4x4x128xf32>, i32 -> vector<4x4x128xf32>
    %35 = vector.shape_cast %5 : vector<4x128xf32> to vector<1x4x128xf32>
    %36 = vector.broadcast %35 : vector<1x4x128xf32> to vector<4x4x128xf32>
    %37 = arith.mulf %34, %36 : vector<4x4x128xf32>
    %38 = arith.addf %33, %37 : vector<4x4x128xf32>
    %c0_20 = arith.constant 0 : index
    %c0_21 = arith.constant 0 : index
    %c0_22 = arith.constant 0 : index
    %c0_23 = arith.constant 0 : index
    %39 = vector.load %arg8[%c0_20, %c0_21, %c0_22, %c0_23] : memref<1x4x4x128xf32, #tpu.memory_space<vmem>>, vector<1x4x4x128xf32>
    %40 = vector.shape_cast %39 : vector<1x4x4x128xf32> to vector<4x4x128xf32>
    %41 = vector.shape_cast %38 : vector<4x4x128xf32> to vector<1x4x4x128xf32>
    tpu.vector_store %arg8[%c0_20, %c0_21, %c0_22, %c0_23], %41 {strides = array<i32>} : memref<1x4x4x128xf32, #tpu.memory_space<vmem>>, vector<1x4x4x128xf32>,
    return
  }
  func.func @transform_0(%arg0: i32, %arg1: i32, %arg2: i32) -> (i32, i32, i32) {
    %c0_i32 = arith.constant 0 : i32
    %c0_i32_0 = arith.constant 0 : i32
    return %arg0, %arg1, %c0_i32 : i32, i32, i32
  }
  func.func @transform_1(%arg0: i32, %arg1: i32, %arg2: i32) -> (i32, i32) {
    %c0_i32 = arith.constant 0 : i32
    %c0_i32_0 = arith.constant 0 : i32
    %c0_i32_1 = arith.constant 0 : i32
    return %c0_i32, %c0_i32_0 : i32, i32
  }
  func.func @transform_2(%arg0: i32, %arg1: i32, %arg2: i32) -> (i32, i32, i32, i32) {
    %c0_i32 = arith.constant 0 : i32
    %c0_i32_0 = arith.constant 0 : i32
    return %arg0, %arg2, %arg1, %c0_i32 : i32, i32, i32, i32
  }
  func.func @transform_3(%arg0: i32, %arg1: i32, %arg2: i32) -> (i32, i32, i32, i32) {
    %c0_i32 = arith.constant 0 : i32
    %c0_i32_0 = arith.constant 0 : i32
    return %arg0, %arg2, %arg1, %c0_i32 : i32, i32, i32, i32
  }
  func.func @transform_4(%arg0: i32, %arg1: i32, %arg2: i32) -> (i32, i32, i32, i32) {
    %c0_i32 = arith.constant 0 : i32
    %c0_i32_0 = arith.constant 0 : i32
    return %arg0, %arg2, %arg1, %c0_i32 : i32, i32, i32, i32
  }
  func.func @transform_5(%arg0: i32, %arg1: i32, %arg2: i32) -> (i32, i32, i32, i32) {
    %c0_i32 = arith.constant 0 : i32
    %c0_i32_0 = arith.constant 0 : i32
    return %arg0, %arg2, %arg1, %c0_i32 : i32, i32, i32, i32
  }
}

</mosaic_0001>

<llo_original>
// kernel: rotary_positional_embedding.1
$region0: #{rotary_positional_embedding.1}
  #allocation0 [shape = 'u32[]', space=smem, size = 0x4, offset = 0x4, fixed_abs, tag = 'smem constant byte address 0x4 - core index']
  #allocation1 [shape = 'u32[144,128]{1,0:T(1,128)}', space=vmem, size = 0x12000, scoped, tag = 'internal scratch']
  #allocation2 [shape = 'f32[4,128]{1,0:T(4,128)}', space=vmem, size = 0x800, scoped, tag = 'scratch operand']
  #allocation3 [shape = 'f32[4,128]{1,0:T(4,128)}', space=vmem, size = 0x800, scoped, tag = 'scratch operand']
  #allocation4 [shape = 'f32[4,128]{1,0:T(4,128)}', space=vmem, size = 0x800, scoped, tag = 'scratch operand']
  %s0 = inlined_call_operand.vmem [shape: f32[2,4,2], index: 0, kind: input, shape index: {}]
  %s1 = inlined_call_operand.vmem [shape: f32[2,128], index: 1, kind: input, shape index: {}]
  %s2 = inlined_call_operand.vmem [shape: f32[2,4,4,128], index: 2, kind: input, shape index: {}, may-alias: {2,4}]
  %s3 = inlined_call_operand.vmem [shape: f32[2,4,4,128], index: 3, kind: input, shape index: {}, may-alias: {3,5}]
  %s4 = inlined_call_operand.vmem [shape: f32[2,4,4,128], index: 4, kind: output, shape index: {0}, may-alias: {2,4}]
  %s5 = inlined_call_operand.vmem [shape: f32[2,4,4,128], index: 5, kind: output, shape index: {1}, may-alias: {3,5}]
  %6 = xla_tuple %s4, %s5
  %s7 = sld [smem:[#allocation0]]
  $region61: #{rotary_positional_embedding.1} parent=0
    _
  %s9 = ssub.s32 1, %s7
  %s10 = scalar_select 0, %s9, %s7
  loop: start=0, step=1, limit=4
  $region2: #{rotary_positional_embedding.1} parent=0 // loop_pre_header
    _
  $region3: #{rotary_positional_embedding.1} parent=0 // loop_header
    %s12 = sphi 0, %s16
    %p13 = scmp.ge.s32.totalorder %s12, 4
    %s19 = sphi 0, %s38
    %s20 = sphi 0, %s34
    %s21 = sphi 0, %s30
    %s22 = sphi 0, %s19
    %s23 = sphi 0, %s20
    %s24 = sphi 0, %s21
    %s25 = sphi 0, %s22
    %s26 = sphi 0, %s23
    %s27 = sphi 0, %s24
    %s43 = sphi 0, %s45
    %s46 = sphi 0, %s43
    %s47 = sphi 0, %s46
    %s63 = sphi 0, %s47
    %s67 = sphi 0, %s67
    %s69 = sphi 0, %s67
    %s70 = sphi 0, %s69
    %s84 = sphi 0, %s70
    %s94 = sphi 0, %s96
    %s97 = sphi 0, %s94
    %s98 = sphi 0, %s97
    %s114 = sphi 0, %s98
    %s124 = sphi 0, %s126
    %s127 = sphi 0, %s124
    %s128 = sphi 0, %s127
    %s144 = sphi 0, %s128
    %s154 = sphi 0, %s156
    %s157 = sphi 0, %s154
    %s158 = sphi 0, %s157
    %s174 = sphi 0, %s158
    %s184 = sphi 0, %s186
    %s187 = sphi 0, %s184
    %s188 = sphi 0, %s187
    %s204 = sphi 0, %s188
  $region4: #{rotary_positional_embedding.1} parent=0 // loop_header_branch
    %15 = sbr.rel (%p13) target = $region8
  $region5: #{rotary_positional_embedding.1} parent=0 // loop_body
    %s17 = ssub.s32 %s12, 1
    %s18 = ssub.s32 %s12, 2
    %s28 = sadd.s32 1, %s21
    %p29 = scmp.ge.s32.totalorder %s28, 1
    %s30 = scalar_select %p29, 0, %s28
    %s31 = sadd.s32 1, %s20
    %s32 = scalar_select %p29, %s31, %s20
    %p33 = scmp.ge.s32.totalorder %s32, 1
    %s34 = scalar_select %p33, 0, %s32
    %s35 = sadd.s32 1, %s19
    %s36 = scalar_select %p33, %s35, %s19
    %p37 = scmp.ge.s32.totalorder %s36, 2
    %s38 = scalar_select %p37, 0, %s36
    %s39 = ssub.s32 %s19, %s38
    %s40 = ssub.s32 %s20, %s34
    %s41 = sor.u32 %s39, %s40
    %p42 = scmp.eq.s32.totalorder %s41, 0
    %s44 = sadd.s32 %s43, 1
    %s45 = scalar_select %p42, %s43, %s44
    %p48 = pneg %p42
    %p49 = scmp.eq.s32.totalorder %s12, 1
    %p50 = por %p48, %p49
    %p51 = scmp.ne.s32.totalorder %s43, %s46
    %p52 = scmp.eq.s32.totalorder %s12, 0
    %p53 = por %p51, %p52
    %p54 = scmp.ne.s32.totalorder %s43, %s46
    %p55 = scmp.eq.s32.totalorder %s17, 1
    %p56 = por %p54, %p55
    %p57 = scmp.ne.s32.totalorder %s46, %s47
    %p58 = scmp.eq.s32.totalorder %s17, 0
    %p59 = por %p57, %p58
    %p60 = scmp.ne.s32.totalorder %s46, %s47
    %p61 = scmp.eq.s32.totalorder %s18, 1
    %p62 = por %p60, %p61
    %p64 = scmp.ne.s32.totalorder %s47, %s63
    %p65 = scmp.eq.s32.totalorder %s18, 0
    %p66 = por %p64, %p65
    %s68 = sadd.s32 %s67, 1
    %p71 = scmp.eq.s32.totalorder %s12, 1
    %p72 = scmp.ne.s32.totalorder %s67, %s69
    %p73 = scmp.eq.s32.totalorder %s12, 0
    %p74 = por %p72, %p73
    %p75 = scmp.ne.s32.totalorder %s67, %s69
    %p76 = scmp.eq.s32.totalorder %s17, 1
    %p77 = por %p75, %p76
    %p78 = scmp.ne.s32.totalorder %s69, %s70
    %p79 = scmp.eq.s32.totalorder %s17, 0
    %p80 = por %p78, %p79
    %p81 = scmp.ne.s32.totalorder %s69, %s70
    %p82 = scmp.eq.s32.totalorder %s18, 1
    %p83 = por %p81, %p82
    %p85 = scmp.ne.s32.totalorder %s70, %s84
    %p86 = scmp.eq.s32.totalorder %s18, 0
    %p87 = por %p85, %p86
    %s88 = ssub.s32 %s19, %s38
    %s89 = ssub.s32 %s21, %s30
    %s90 = sor.u32 %s88, %s89
    %s91 = ssub.s32 %s20, %s34
    %s92 = sor.u32 %s90, %s91
    %p93 = scmp.eq.s32.totalorder %s92, 0
    %s95 = sadd.s32 %s94, 1
    %s96 = scalar_select %p93, %s94, %s95
    %p99 = pneg %p93
    %p100 = scmp.eq.s32.totalorder %s12, 1
    %p101 = por %p99, %p100
    %p102 = scmp.ne.s32.totalorder %s94, %s97
    %p103 = scmp.eq.s32.totalorder %s12, 0
    %p104 = por %p102, %p103
    %p105 = scmp.ne.s32.totalorder %s94, %s97
    %p106 = scmp.eq.s32.totalorder %s17, 1
    %p107 = por %p105, %p106
    %p108 = scmp.ne.s32.totalorder %s97, %s98
    %p109 = scmp.eq.s32.totalorder %s17, 0
    %p110 = por %p108, %p109
    %p111 = scmp.ne.s32.totalorder %s97, %s98
    %p112 = scmp.eq.s32.totalorder %s18, 1
    %p113 = por %p111, %p112
    %p115 = scmp.ne.s32.totalorder %s98, %s114
    %p116 = scmp.eq.s32.totalorder %s18, 0
    %p117 = por %p115, %p116
    %s118 = ssub.s32 %s19, %s38
    %s119 = ssub.s32 %s21, %s30
    %s120 = sor.u32 %s118, %s119
    %s121 = ssub.s32 %s20, %s34
    %s122 = sor.u32 %s120, %s121
    %p123 = scmp.eq.s32.totalorder %s122, 0
    %s125 = sadd.s32 %s124, 1
    %s126 = scalar_select %p123, %s124, %s125
    %p129 = pneg %p123
    %p130 = scmp.eq.s32.totalorder %s12, 1
    %p131 = por %p129, %p130
    %p132 = scmp.ne.s32.totalorder %s124, %s127
    %p133 = scmp.eq.s32.totalorder %s12, 0
    %p134 = por %p132, %p133
    %p135 = scmp.ne.s32.totalorder %s124, %s127
    %p136 = scmp.eq.s32.totalorder %s17, 1
    %p137 = por %p135, %p136
    %p138 = scmp.ne.s32.totalorder %s127, %s128
    %p139 = scmp.eq.s32.totalorder %s17, 0
    %p140 = por %p138, %p139
    %p141 = scmp.ne.s32.totalorder %s127, %s128
    %p142 = scmp.eq.s32.totalorder %s18, 1
    %p143 = por %p141, %p142
    %p145 = scmp.ne.s32.totalorder %s128, %s144
    %p146 = scmp.eq.s32.totalorder %s18, 0
    %p147 = por %p145, %p146
    %s148 = ssub.s32 %s19, %s38
    %s149 = ssub.s32 %s21, %s30
    %s150 = sor.u32 %s148, %s149
    %s151 = ssub.s32 %s20, %s34
    %s152 = sor.u32 %s150, %s151
    %p153 = scmp.eq.s32.totalorder %s152, 0
    %s155 = sadd.s32 %s154, 1
    %s156 = scalar_select %p153, %s154, %s155
    %p159 = pneg %p153
    %p160 = scmp.eq.s32.totalorder %s12, 1
    %p161 = por %p159, %p160
    %p162 = scmp.ne.s32.totalorder %s154, %s157
    %p163 = scmp.eq.s32.totalorder %s12, 0
    %p164 = por %p162, %p163
    %p165 = scmp.ne.s32.totalorder %s154, %s157
    %p166 = scmp.eq.s32.totalorder %s17, 1
    %p167 = por %p165, %p166
    %p168 = scmp.ne.s32.totalorder %s157, %s158
    %p169 = scmp.eq.s32.totalorder %s17, 0
    %p170 = por %p168, %p169
    %p171 = scmp.ne.s32.totalorder %s157, %s158
    %p172 = scmp.eq.s32.totalorder %s18, 1
    %p173 = por %p171, %p172
    %p175 = scmp.ne.s32.totalorder %s158, %s174
    %p176 = scmp.eq.s32.totalorder %s18, 0
    %p177 = por %p175, %p176
    %s178 = ssub.s32 %s19, %s38
    %s179 = ssub.s32 %s21, %s30
    %s180 = sor.u32 %s178, %s179
    %s181 = ssub.s32 %s20, %s34
    %s182 = sor.u32 %s180, %s181
    %p183 = scmp.eq.s32.totalorder %s182, 0
    %s185 = sadd.s32 %s184, 1
    %s186 = scalar_select %p183, %s184, %s185
    %p189 = pneg %p183
    %p190 = scmp.eq.s32.totalorder %s12, 1
    %p191 = por %p189, %p190
    %p192 = scmp.ne.s32.totalorder %s184, %s187
    %p193 = scmp.eq.s32.totalorder %s12, 0
    %p194 = por %p192, %p193
    %p195 = scmp.ne.s32.totalorder %s184, %s187
    %p196 = scmp.eq.s32.totalorder %s17, 1
    %p197 = por %p195, %p196
    %p198 = scmp.ne.s32.totalorder %s187, %s188
    %p199 = scmp.eq.s32.totalorder %s17, 0
    %p200 = por %p198, %p199
    %p201 = scmp.ne.s32.totalorder %s187, %s188
    %p202 = scmp.eq.s32.totalorder %s18, 1
    %p203 = por %p201, %p202
    %p205 = scmp.ne.s32.totalorder %s188, %s204
    %p206 = scmp.eq.s32.totalorder %s18, 0
    %p207 = por %p205, %p206
    %p208 = scmp.le.s32.totalorder 1, %s12
    %p209 = scmp.lt.s32.totalorder %s12, 3
    %p210 = pnand %p208, %p209
    %p211 = pneg %p210
    // Predicated region
    $region9: #{rotary_positional_embedding.1} parent=5 // pred_check
      _
    $region10: #{rotary_positional_embedding.1} parent=5 // pred_check_branch
      %213 = sbr.rel (%p210) target = $region12
    $region11: #{rotary_positional_embedding.1} parent=5 // pred_region
      %s214 = ssub.s32 %s12, 1
      // Predicated region
      $region13: #{rotary_positional_embedding.1} parent=11 // pred_check
        %p215 = pneg %p80
      $region14: #{rotary_positional_embedding.1} parent=11 // pred_check_branch
        %217 = sbr.rel (%p215) target = $region16
      $region15: #{rotary_positional_embedding.1} parent=11 // pred_region
        _
      $region16: #{rotary_positional_embedding.1} parent=11 // pred_fallthru
        _
    $region12: #{rotary_positional_embedding.1} parent=5 // pred_fallthru
      _
    %p218 = scmp.lt.s32.totalorder %s12, 2
    // Predicated region
    $region17: #{rotary_positional_embedding.1} parent=5 // pred_check
      %p219 = pneg %p218
    $region18: #{rotary_positional_embedding.1} parent=5 // pred_check_branch
      %221 = sbr.rel (%p219) target = $region20
    $region19: #{rotary_positional_embedding.1} parent=5 // pred_region
      // Predicated region
      $region21: #{rotary_positional_embedding.1} parent=19 // pred_check
        %p222 = pneg %p53
      $region22: #{rotary_positional_embedding.1} parent=19 // pred_check_branch
        %224 = sbr.rel (%p222) target = $region24
      $region23: #{rotary_positional_embedding.1} parent=19 // pred_region
        %p225 = scmp.lt.s32.totalorder %s19, 1
        %s226 = scalar_select %p225, %s19, 1
        %p227 = scmp.lt.s32.totalorder %s20, 0
        %s228 = scalar_select %p227, %s20, 0
        %s229 = sadd.s32 %s228, %s226
        %s230 = smul.addr %s229, 4
        %s231 = scalar_lea.vmem %s0, %s230
      $region24: #{rotary_positional_embedding.1} parent=19 // pred_fallthru
        _
      // Predicated region
      $region25: #{rotary_positional_embedding.1} parent=19 // pred_check
        %p232 = pneg %p104
      $region26: #{rotary_positional_embedding.1} parent=19 // pred_check_branch
        %234 = sbr.rel (%p232) target = $region28
      $region27: #{rotary_positional_embedding.1} parent=19 // pred_region
        %s235 = smul.u32 4, %s21
        %p236 = scmp.lt.s32.totalorder %s19, 1
        %s237 = scalar_select %p236, %s19, 1
        %p238 = scmp.lt.s32.totalorder %s235, 3
        %s239 = scalar_select %p238, %s235, 3
        %p240 = scmp.lt.s32.totalorder %s20, 0
        %s241 = scalar_select %p240, %s20, 0
        %s242 = sadd.s32 %s241, %s239
        %s243 = smul.addr %s237, 4
        %s244 = sadd.s32 %s242, %s243
        %s245 = smul.addr %s244, 4
        %s246 = scalar_lea.vmem %s2, %s245
        %s247 = smul.u32 4, %s21
      $region28: #{rotary_positional_embedding.1} parent=19 // pred_fallthru
        _
      // Predicated region
      $region29: #{rotary_positional_embedding.1} parent=19 // pred_check
        %p248 = pneg %p134
      $region30: #{rotary_positional_embedding.1} parent=19 // pred_check_branch
        %250 = sbr.rel (%p248) target = $region32
      $region31: #{rotary_positional_embedding.1} parent=19 // pred_region
        %s251 = smul.u32 4, %s21
        %p252 = scmp.lt.s32.totalorder %s19, 1
        %s253 = scalar_select %p252, %s19, 1
        %p254 = scmp.lt.s32.totalorder %s251, 3
        %s255 = scalar_select %p254, %s251, 3
        %p256 = scmp.lt.s32.totalorder %s20, 0
        %s257 = scalar_select %p256, %s20, 0
        %s258 = sadd.s32 %s257, %s255
        %s259 = smul.addr %s253, 4
        %s260 = sadd.s32 %s258, %s259
        %s261 = smul.addr %s260, 4
        %s262 = scalar_lea.vmem %s3, %s261
        %s263 = smul.u32 4, %s21
      $region32: #{rotary_positional_embedding.1} parent=19 // pred_fallthru
        _
    $region20: #{rotary_positional_embedding.1} parent=5 // pred_fallthru
      _
    %p264 = scmp.le.s32.totalorder 1, %s12
    %p265 = scmp.lt.s32.totalorder %s12, 3
    %p266 = pnand %p264, %p265
    %p267 = pneg %p266
    // Predicated region
    $region33: #{rotary_positional_embedding.1} parent=5 // pred_check
      _
    $region34: #{rotary_positional_embedding.1} parent=5 // pred_check_branch
      %269 = sbr.rel (%p266) target = $region36
    $region35: #{rotary_positional_embedding.1} parent=5 // pred_region
      %s270 = ssub.s32 %s12, 1
      %p271 = scmp.lt.s32.totalorder %s22, 1
      %s272 = scalar_select %p271, %s22, 1
      %p273 = scmp.lt.s32.totalorder %s23, 0
      %s274 = scalar_select %p273, %s23, 0
      %s275 = sadd.s32 %s274, %s272
      %s276 = smul.addr %s275, 4
      %s277 = scalar_lea.vmem %s0, %s276
      %p278 = pneg %p59
      %p279 = pneg %p56
      %p280 = pneg %p80
      %p281 = pneg %p77
      %s282 = smul.u32 4, %s24
      %p283 = scmp.lt.s32.totalorder %s22, 1
      %s284 = scalar_select %p283, %s22, 1
      %p285 = scmp.lt.s32.totalorder %s282, 3
      %s286 = scalar_select %p285, %s282, 3
      %p287 = scmp.lt.s32.totalorder %s23, 0
      %s288 = scalar_select %p287, %s23, 0
      %s289 = sadd.s32 %s288, %s286
      %s290 = smul.addr %s284, 4
      %s291 = sadd.s32 %s289, %s290
      %s292 = smul.addr %s291, 4
      %s293 = scalar_lea.vmem %s2, %s292
      %p294 = pneg %p110
      %p295 = pneg %p107
      %s296 = smul.u32 4, %s24
      %p297 = scmp.lt.s32.totalorder %s22, 1
      %s298 = scalar_select %p297, %s22, 1
      %p299 = scmp.lt.s32.totalorder %s296, 3
      %s300 = scalar_select %p299, %s296, 3
      %p301 = scmp.lt.s32.totalorder %s23, 0
      %s302 = scalar_select %p301, %s23, 0
      %s303 = sadd.s32 %s302, %s300
      %s304 = smul.addr %s298, 4
      %s305 = sadd.s32 %s303, %s304
      %s306 = smul.addr %s305, 4
      %s307 = scalar_lea.vmem %s3, %s306
      %p308 = pneg %p140
      %p309 = pneg %p137
      %p310 = pneg %p170
      %p311 = pneg %p167
      %s312 = smul.u32 4, %s24
      %p313 = scmp.lt.s32.totalorder %s22, 1
      %s314 = scalar_select %p313, %s22, 1
      %p315 = scmp.lt.s32.totalorder %s312, 3
      %s316 = scalar_select %p315, %s312, 3
      %p317 = scmp.lt.s32.totalorder %s23, 0
      %s318 = scalar_select %p317, %s23, 0
      %s319 = sadd.s32 %s318, %s316
      %s320 = smul.addr %s314, 4
      %s321 = sadd.s32 %s319, %s320
      %s322 = smul.addr %s321, 4
      %s323 = scalar_lea.vmem %s4, %s322
      %p324 = pneg %p200
      %p325 = pneg %p197
      %s326 = smul.u32 4, %s24
      %p327 = scmp.lt.s32.totalorder %s22, 1
      %s328 = scalar_select %p327, %s22, 1
      %p329 = scmp.lt.s32.totalorder %s326, 3
      %s330 = scalar_select %p329, %s326, 3
      %p331 = scmp.lt.s32.totalorder %s23, 0
      %s332 = scalar_select %p331, %s23, 0
      %s333 = sadd.s32 %s332, %s330
      %s334 = smul.addr %s328, 4
      %s335 = sadd.s32 %s333, %s334
      %s336 = smul.addr %s335, 4
      %s337 = scalar_lea.vmem %s5, %s336
      %p338 = scmp.lt.s32.totalorder %s22, 1
      %s339 = scalar_select %p338, %s22, 1
      %p340 = scmp.lt.s32.totalorder %s23, 0
      %s341 = scalar_select %p340, %s23, 0
      %s342 = sadd.s32 %s341, %s339
      %s343 = smul.addr %s342, 4
      %s344 = scalar_lea.vmem %s0, %s343
      %s345 = smul.u32 4, %s24
      %p346 = scmp.lt.s32.totalorder %s22, 1
      %s347 = scalar_select %p346, %s22, 1
      %p348 = scmp.lt.s32.totalorder %s345, 3
      %s349 = scalar_select %p348, %s345, 3
      %p350 = scmp.lt.s32.totalorder %s23, 0
      %s351 = scalar_select %p350, %s23, 0
      %s352 = sadd.s32 %s351, %s349
      %s353 = smul.addr %s347, 4
      %s354 = sadd.s32 %s352, %s353
      %s355 = smul.addr %s354, 4
      %s356 = scalar_lea.vmem %s2, %s355
      %s357 = smul.u32 4, %s24
      %s358 = smul.u32 4, %s24
      %p359 = scmp.lt.s32.totalorder %s22, 1
      %s360 = scalar_select %p359, %s22, 1
      %p361 = scmp.lt.s32.totalorder %s358, 3
      %s362 = scalar_select %p361, %s358, 3
      %p363 = scmp.lt.s32.totalorder %s23, 0
      %s364 = scalar_select %p363, %s23, 0
      %s365 = sadd.s32 %s364, %s362
      %s366 = smul.addr %s360, 4
      %s367 = sadd.s32 %s365, %s366
      %s368 = smul.addr %s367, 4
      %s369 = scalar_lea.vmem %s3, %s368
      %s370 = smul.u32 4, %s24
      %s371 = smul.u32 4, %s24
      %p372 = scmp.lt.s32.totalorder %s22, 1
      %s373 = scalar_select %p372, %s22, 1
      %p374 = scmp.lt.s32.totalorder %s371, 3
      %s375 = scalar_select %p374, %s371, 3
      %p376 = scmp.lt.s32.totalorder %s23, 0
      %s377 = scalar_select %p376, %s23, 0
      %s378 = sadd.s32 %s377, %s375
      %s379 = smul.addr %s373, 4
      %s380 = sadd.s32 %s378, %s379
      %s381 = smul.addr %s380, 4
      %s382 = scalar_lea.vmem %s4, %s381
      %s383 = smul.u32 4, %s24
      %s384 = smul.u32 4, %s24
      %p385 = scmp.lt.s32.totalorder %s22, 1
      %s386 = scalar_select %p385, %s22, 1
      %p387 = scmp.lt.s32.totalorder %s384, 3
      %s388 = scalar_select %p387, %s384, 3
      %p389 = scmp.lt.s32.totalorder %s23, 0
      %s390 = scalar_select %p389, %s23, 0
      %s391 = sadd.s32 %s390, %s388
      %s392 = smul.addr %s386, 4
      %s393 = sadd.s32 %s391, %s392
      %s394 = smul.addr %s393, 4
      %s395 = scalar_lea.vmem %s5, %s394
      %s396 = smul.u32 4, %s24
      %p397 = scmp.eq.s32.totalorder %s24, 0
      // Predicated region
      $region37: #{rotary_positional_embedding.1} parent=35 // pred_check
        %p398 = pneg %p397
      $region38: #{rotary_positional_embedding.1} parent=35 // pred_check_branch
        %400 = sbr.rel (%p398) target = $region40
      $region39: #{rotary_positional_embedding.1} parent=35 // pred_region
        %v401 = vld [vmem:[%s344] sm:$0xf]
        %v402 = vld [vmem:[%s1] sm:$0x3]
        %404 = vset.pattern.permute.xlu0 0
        %405 = vperm.xlu0 %404, %v401
        %v406 = vpop.permute.xlu0 %405
        %v408 = vlaneseq
        %v409 = vshrl.u32 %v408, 7
        %v410 = vsub.s32 0, %v409
        %v411 = vrot.slane %v402, %v410
        %v412 = vmul.f32 %v406, %v411
        %413 = vset.pattern.permute.xlu0 1
        %414 = vperm.xlu0 %413, %v401
        %v415 = vpop.permute.xlu0 %414
        %v417 = vlaneseq
        %v418 = vshrl.u32 %v417, 7
        %v419 = vsub.s32 1, %v418
        %v420 = vrot.slane %v402, %v419
        %v421 = vmul.f32 %v415, %v420
        %v422 = vadd.f32 %v412, %v421
        %v423 = vand.u32 2147483647, %v422
        %vm424 = vcmp.le.f32.partialorder %v423, 0.7853982
        %vm425 = vcmp.lt.s32.totalorder %v422, 0
        %v426 = vand.u32 %v422, 2139095040
        %v427 = vshrl.u32 %v426, 23
        %v428 = vsub.s32 %v427, 127
        %v429 = vand.u32 2147483647, %v422
        %v430 = vand.u32 %v429, 8388607
        %v431 = vor.u32 %v430, 8388608
        %v432 = vsub.s32 0, %v431
        %v433 = vadd.s32 %v428, 1
        %vm434 = vcmp.gt.s32.totalorder %v433, 0
        %v435 = vsel %vm434, %v433, 0
        %v436 = vshrl.u32 %v435, 5
        %v437 = vand.u32 %v435, 31
        %v438 = vsub.s32 32, %v437
        %v439 = vshrl.u32 683565275, %v438
        %v440 = vshll.u32 683565275, %v437
        %v441 = vshrl.u32 2475754826, %v438
        %v442 = vor.u32 %v440, %v441
        %v443 = vshll.u32 2475754826, %v437
        %v444 = vshrl.u32 2131351028, %v438
        %v445 = vor.u32 %v443, %v444
        %v446 = vshll.u32 2131351028, %v437
        %v447 = vshrl.u32 2102212464, %v438
        %v448 = vor.u32 %v446, %v447
        %v449 = vshll.u32 2102212464, %v437
        %v450 = vshrl.u32 920167782, %v438
        %v451 = vor.u32 %v449, %v450
        %v452 = vshll.u32 920167782, %v437
        %v453 = vshrl.u32 1326507024, %v438
        %v454 = vor.u32 %v452, %v453
        %vm455 = vcmp.lt.s32.totalorder %v436, 1
        %vm456 = vcmp.lt.s32.totalorder %v436, 2
        %vm457 = vcmp.lt.s32.totalorder %v436, 3
        %vm458 = vcmp.lt.s32.totalorder %v436, 4
        %v459 = vsel %vm455, %v439, %v442
        %v460 = vsel %vm458, %v448, 2102212464
        %v461 = vsel %vm457, %v445, %v460
        %v462 = vsel %vm456, %v459, %v461
        %v463 = vsel %vm455, %v442, %v445
        %v464 = vsel %vm458, %v451, 920167782
        %v465 = vsel %vm457, %v448, %v464
        %v466 = vsel %vm456, %v463, %v465
        %v467 = vsel %vm455, %v445, %v448
        %v468 = vsel %vm458, %v454, 1326507024
        %v469 = vsel %vm457, %v451, %v468
        %v470 = vsel %vm456, %v467, %v469
        %v471 = vshll.u32 %v431, 8
        %v472 = vmul.u32.u64.compose %v471, %v470
        %v473 = vextract.low.u32 %v472
        %v474 = vextract.high.u32 %v472
        %v475 = vmul.u32.u64.compose %v471, %v466
        %v476 = vextract.low.u32 %v475
        %v477 = vextract.high.u32 %v475
        %v478 = vmul.u32 %v471, %v462
        %v479 = vadd.s32 %v474, %v476
        %vm480 = vc.u32 %v474, %v476
        %v481 = vadd.s32 %v477, 1
        %v482 = vsel %vm480, %v481, %v477
        %v483 = vadd.s32 %v478, %v482
        %v484 = vadd.s32 %v483, 536870912
        %v485 = vshrl.u32 %v484, 30
        %v486 = vshll.u32 %v485, 30
        %v487 = vsub.s32 %v483, %v486
        %vm488 = vcmp.lt.s32.totalorder %v487, 0
        %v489 = vsub.s32 0, %v487
        %v490 = vsel %vm488, %v489, %v487
        %v491 = vclz %v490
        %v492 = vsub.s32 %v491, 2
        %vm493 = vcmp.gt.s32.totalorder 0, %v492
        %v494 = vsel %vm493, 0, %v492
        %v495 = vsub.s32 32, %v494
        %v496 = vshll.u32 %v487, %v494
        %v497 = vshrl.u32 %v479, %v495
        %v498 = vor.u32 %v496, %v497
        %v499 = vsub.s32 4294967266, %v494
        %v500 = vadd.s32 %v499, 127
        %v501 = vshll.u32 %v500, 23
        %v502 = vor.u32 4788187, %v501
        %v503 = vand.u32 2147483647, %v502
        %v505 = vcvt.s32.f32 %v498
        %v506 = vmul.f32 %v505, %v503
        %v507 = vxor.u32 %v506, 2147483648
        %v508 = vsel %vm425, %v507, %v506
        %v509 = vsub.s32 4, %v485
        %v510 = vsel %vm425, %v509, %v485
        %v511 = vsel %vm424, %v422, %v508
        %v512 = vsel %vm424, 0, %v510
        %v513 = vcosq.f32.pop %v511
        %v514 = vsinq.f32.pop %v511
        %vm515 = vweird.f32 %v422
        %v516 = vand.u32 %v512, 3
        %vm517 = vcmp.lt.s32.totalorder %v516, 2
        %vm518 = vcmp.eq.s32.totalorder %v516, 0
        %v519 = vxor.u32 %v514, 2147483648
        %v520 = vsel %vm518, %v513, %v519
        %vm521 = vcmp.eq.s32.totalorder %v516, 2
        %v522 = vxor.u32 %v513, 2147483648
        %v523 = vsel %vm521, %v522, %v514
        %v524 = vsel %vm517, %v520, %v523
        %v525 = vsel %vm515, nan, %v524
        %v526 = vand.u32 2147483647, %v422
        %vm527 = vcmp.le.f32.partialorder %v526, 0.7853982
        %vm528 = vcmp.lt.s32.totalorder %v422, 0
        %v529 = vand.u32 %v422, 2139095040
        %v530 = vshrl.u32 %v529, 23
        %v531 = vsub.s32 %v530, 127
        %v532 = vand.u32 2147483647, %v422
        %v533 = vand.u32 %v532, 8388607
        %v534 = vor.u32 %v533, 8388608
        %v535 = vsub.s32 0, %v534
        %v536 = vadd.s32 %v531, 1
        %vm537 = vcmp.gt.s32.totalorder %v536, 0
        %v538 = vsel %vm537, %v536, 0
        %v539 = vshrl.u32 %v538, 5
        %v540 = vand.u32 %v538, 31
        %v541 = vsub.s32 32, %v540
        %v542 = vshrl.u32 683565275, %v541
        %v543 = vshll.u32 683565275, %v540
        %v544 = vshrl.u32 2475754826, %v541
        %v545 = vor.u32 %v543, %v544
        %v546 = vshll.u32 2475754826, %v540
        %v547 = vshrl.u32 2131351028, %v541
        %v548 = vor.u32 %v546, %v547
        %v549 = vshll.u32 2131351028, %v540
        %v550 = vshrl.u32 2102212464, %v541
        %v551 = vor.u32 %v549, %v550
        %v552 = vshll.u32 2102212464, %v540
        %v553 = vshrl.u32 920167782, %v541
        %v554 = vor.u32 %v552, %v553
        %v555 = vshll.u32 920167782, %v540
        %v556 = vshrl.u32 1326507024, %v541
        %v557 = vor.u32 %v555, %v556
        %vm558 = vcmp.lt.s32.totalorder %v539, 1
        %vm559 = vcmp.lt.s32.totalorder %v539, 2
        %vm560 = vcmp.lt.s32.totalorder %v539, 3
        %vm561 = vcmp.lt.s32.totalorder %v539, 4
        %v562 = vsel %vm558, %v542, %v545
        %v563 = vsel %vm561, %v551, 2102212464
        %v564 = vsel %vm560, %v548, %v563
        %v565 = vsel %vm559, %v562, %v564
        %v566 = vsel %vm558, %v545, %v548
        %v567 = vsel %vm561, %v554, 920167782
        %v568 = vsel %vm560, %v551, %v567
        %v569 = vsel %vm559, %v566, %v568
        %v570 = vsel %vm558, %v548, %v551
        %v571 = vsel %vm561, %v557, 1326507024
        %v572 = vsel %vm560, %v554, %v571
        %v573 = vsel %vm559, %v570, %v572
        %v574 = vshll.u32 %v534, 8
        %v575 = vmul.u32.u64.compose %v574, %v573
        %v576 = vextract.low.u32 %v575
        %v577 = vextract.high.u32 %v575
        %v578 = vmul.u32.u64.compose %v574, %v569
        %v579 = vextract.low.u32 %v578
        %v580 = vextract.high.u32 %v578
        %v581 = vmul.u32 %v574, %v565
        %v582 = vadd.s32 %v577, %v579
        %vm583 = vc.u32 %v577, %v579
        %v584 = vadd.s32 %v580, 1
        %v585 = vsel %vm583, %v584, %v580
        %v586 = vadd.s32 %v581, %v585
        %v587 = vadd.s32 %v586, 536870912
        %v588 = vshrl.u32 %v587, 30
        %v589 = vshll.u32 %v588, 30
        %v590 = vsub.s32 %v586, %v589
        %vm591 = vcmp.lt.s32.totalorder %v590, 0
        %v592 = vsub.s32 0, %v590
        %v593 = vsel %vm591, %v592, %v590
        %v594 = vclz %v593
        %v595 = vsub.s32 %v594, 2
        %vm596 = vcmp.gt.s32.totalorder 0, %v595
        %v597 = vsel %vm596, 0, %v595
        %v598 = vsub.s32 32, %v597
        %v599 = vshll.u32 %v590, %v597
        %v600 = vshrl.u32 %v582, %v598
        %v601 = vor.u32 %v599, %v600
        %v602 = vsub.s32 4294967266, %v597
        %v603 = vadd.s32 %v602, 127
        %v604 = vshll.u32 %v603, 23
        %v605 = vor.u32 4788187, %v604
        %v606 = vand.u32 2147483647, %v605
        %v608 = vcvt.s32.f32 %v601
        %v609 = vmul.f32 %v608, %v606
        %v610 = vxor.u32 %v609, 2147483648
        %v611 = vsel %vm528, %v610, %v609
        %v612 = vsub.s32 4, %v588
        %v613 = vsel %vm528, %v612, %v588
        %v614 = vsel %vm527, %v422, %v611
        %v615 = vsel %vm527, 0, %v613
        %v616 = vcosq.f32.pop %v614
        %v617 = vsinq.f32.pop %v614
        %vm618 = vweird.f32 %v422
        %v619 = vadd.s32 %v615, 3
        %v620 = vand.u32 %v619, 3
        %vm621 = vcmp.lt.s32.totalorder %v620, 2
        %vm622 = vcmp.eq.s32.totalorder %v620, 0
        %v623 = vxor.u32 %v617, 2147483648
        %v624 = vsel %vm622, %v616, %v623
        %vm625 = vcmp.eq.s32.totalorder %v620, 2
        %v626 = vxor.u32 %v616, 2147483648
        %v627 = vsel %vm625, %v626, %v617
        %v628 = vsel %vm621, %v624, %v627
        %v629 = vsel %vm618, nan, %v628
        %v630 = vlaneseq
        %v631 = vand.u32 %v630, 127
        %vm632 = vcmp.lt.s32.totalorder %v631, 0
        %v633 = vsub.s32 0, %v631
        %v634 = vsel %vm632, %v633, %v631
        %v635 = vshrl.u32 %v634, 6
        %v636 = vand.u32 %v634, 63
        %v637 = vsub.s32 0, %v636
        %v638 = vsel %vm632, %v637, %v636
        %vm639 = vcmp.ne.s32.totalorder %v638, 0
        %vm640 = vcmp.lt.s32.totalorder %v638, 0
        %vm641 = vmand %vm640, %vm639
        %v642 = vadd.s32 %v638, 64
        %v643 = vsel %vm641, %v642, %v638
        %644 = vst [vmem:[#allocation2] sm:$0xf] %v525
        %vm645 = vcmp.lt.s32.totalorder %v643, 32
        %v646 = vsub.f32 0.0, %v629
        %v647 = vsel %vm645, %v646, 0.0
        %648 = vst [vmem:[#allocation3] sm:$0xf] %v647
        %vm649 = vcmp.ge.s32.totalorder %v643, 32
        %vm650 = vcmp.lt.s32.totalorder %v643, 64
        %vm651 = vmand %vm649, %vm650
        %v652 = vsel %vm651, %v629, 0.0
        %653 = vst [vmem:[#allocation4] sm:$0xf] %v652
      $region40: #{rotary_positional_embedding.1} parent=35 // pred_fallthru
        _
      %v654 = vld [vmem:[#allocation2] sm:$0xf]
      %v655 = vld [vmem:[#allocation3] sm:$0xf]
      %v656 = vld [vmem:[#allocation4] sm:$0xf]
      %v657 = vld [vmem:[%s356] sm:$0xf]
      %v658 = vld [vmem:[%s356 + $0x4] sm:$0xf]
      %v659 = vld [vmem:[%s356 + $0x8] sm:$0xf]
      %v660 = vld [vmem:[%s356 + $0xc] sm:$0xf]
      %v661 = vmul.f32 %v657, %v654
      %v662 = vmul.f32 %v658, %v654
      %v663 = vmul.f32 %v659, %v654
      %v664 = vmul.f32 %v660, %v654
      %665 = vrot.lane.b32.xlu0 %v657, 96
      %v666 = vpop.permute.xlu0 %665
      %667 = vrot.lane.b32.xlu0 %v658, 96
      %v668 = vpop.permute.xlu0 %667
      %669 = vrot.lane.b32.xlu0 %v659, 96
      %v670 = vpop.permute.xlu0 %669
      %671 = vrot.lane.b32.xlu0 %v660, 96
      %v672 = vpop.permute.xlu0 %671
      %v673 = vmul.f32 %v666, %v655
      %v674 = vmul.f32 %v668, %v655
      %v675 = vmul.f32 %v670, %v655
      %v676 = vmul.f32 %v672, %v655
      %v677 = vadd.f32 %v661, %v673
      %v678 = vadd.f32 %v662, %v674
      %v679 = vadd.f32 %v663, %v675
      %v680 = vadd.f32 %v664, %v676
      %681 = vrot.lane.b32.xlu0 %v657, 32
      %v682 = vpop.permute.xlu0 %681
      %683 = vrot.lane.b32.xlu0 %v658, 32
      %v684 = vpop.permute.xlu0 %683
      %685 = vrot.lane.b32.xlu0 %v659, 32
      %v686 = vpop.permute.xlu0 %685
      %687 = vrot.lane.b32.xlu0 %v660, 32
      %v688 = vpop.permute.xlu0 %687
      %v689 = vmul.f32 %v682, %v656
      %v690 = vmul.f32 %v684, %v656
      %v691 = vmul.f32 %v686, %v656
      %v692 = vmul.f32 %v688, %v656
      %v693 = vadd.f32 %v677, %v689
      %v694 = vadd.f32 %v678, %v690
      %v695 = vadd.f32 %v679, %v691
      %v696 = vadd.f32 %v680, %v692
      %697 = vst [vmem:[%s382] sm:$0xf] %v693
      %698 = vst [vmem:[%s382 + $0x4] sm:$0xf] %v694
      %699 = vst [vmem:[%s382 + $0x8] sm:$0xf] %v695
      %700 = vst [vmem:[%s382 + $0xc] sm:$0xf] %v696
      %v701 = vld [vmem:[%s369] sm:$0xf]
      %v702 = vld [vmem:[%s369 + $0x4] sm:$0xf]
      %v703 = vld [vmem:[%s369 + $0x8] sm:$0xf]
      %v704 = vld [vmem:[%s369 + $0xc] sm:$0xf]
      %v705 = vmul.f32 %v701, %v654
      %v706 = vmul.f32 %v702, %v654
      %v707 = vmul.f32 %v703, %v654
      %v708 = vmul.f32 %v704, %v654
      %709 = vrot.lane.b32.xlu0 %v701, 96
      %v710 = vpop.permute.xlu0 %709
      %711 = vrot.lane.b32.xlu0 %v702, 96
      %v712 = vpop.permute.xlu0 %711
      %713 = vrot.lane.b32.xlu0 %v703, 96
      %v714 = vpop.permute.xlu0 %713
      %715 = vrot.lane.b32.xlu0 %v704, 96
      %v716 = vpop.permute.xlu0 %715
      %v717 = vmul.f32 %v710, %v655
      %v718 = vmul.f32 %v712, %v655
      %v719 = vmul.f32 %v714, %v655
      %v720 = vmul.f32 %v716, %v655
      %v721 = vadd.f32 %v705, %v717
      %v722 = vadd.f32 %v706, %v718
      %v723 = vadd.f32 %v707, %v719
      %v724 = vadd.f32 %v708, %v720
      %725 = vrot.lane.b32.xlu0 %v701, 32
      %v726 = vpop.permute.xlu0 %725
      %727 = vrot.lane.b32.xlu0 %v702, 32
      %v728 = vpop.permute.xlu0 %727
      %729 = vrot.lane.b32.xlu0 %v703, 32
      %v730 = vpop.permute.xlu0 %729
      %731 = vrot.lane.b32.xlu0 %v704, 32
      %v732 = vpop.permute.xlu0 %731
      %v733 = vmul.f32 %v726, %v656
      %v734 = vmul.f32 %v728, %v656
      %v735 = vmul.f32 %v730, %v656
      %v736 = vmul.f32 %v732, %v656
      %v737 = vadd.f32 %v721, %v733
      %v738 = vadd.f32 %v722, %v734
      %v739 = vadd.f32 %v723, %v735
      %v740 = vadd.f32 %v724, %v736
      %741 = vst [vmem:[%s395] sm:$0xf] %v737
      %742 = vst [vmem:[%s395 + $0x4] sm:$0xf] %v738
      %743 = vst [vmem:[%s395 + $0x8] sm:$0xf] %v739
      %744 = vst [vmem:[%s395 + $0xc] sm:$0xf] %v740
      %s745 = smul.u32 4, %s24
      %p746 = scmp.lt.s32.totalorder %s22, 1
      %s747 = scalar_select %p746, %s22, 1
      %p748 = scmp.lt.s32.totalorder %s745, 3
      %s749 = scalar_select %p748, %s745, 3
      %p750 = scmp.lt.s32.totalorder %s23, 0
      %s751 = scalar_select %p750, %s23, 0
      %s752 = sadd.s32 %s751, %s749
      %s753 = smul.addr %s747, 4
      %s754 = sadd.s32 %s752, %s753
      %s755 = smul.addr %s754, 4
      %s756 = scalar_lea.vmem %s4, %s755
      %s757 = smul.u32 4, %s24
      %p758 = scmp.lt.s32.totalorder %s22, 1
      %s759 = scalar_select %p758, %s22, 1
      %p760 = scmp.lt.s32.totalorder %s757, 3
      %s761 = scalar_select %p760, %s757, 3
      %p762 = scmp.lt.s32.totalorder %s23, 0
      %s763 = scalar_select %p762, %s23, 0
      %s764 = sadd.s32 %s763, %s761
      %s765 = smul.addr %s759, 4
      %s766 = sadd.s32 %s764, %s765
      %s767 = smul.addr %s766, 4
      %s768 = scalar_lea.vmem %s5, %s767
      // Predicated region
      $region41: #{rotary_positional_embedding.1} parent=35 // pred_check
        %p769 = pneg %p167
      $region42: #{rotary_positional_embedding.1} parent=35 // pred_check_branch
        %771 = sbr.rel (%p769) target = $region44
      $region43: #{rotary_positional_embedding.1} parent=35 // pred_region
        %s772 = smul.u32 4, %s24
      $region44: #{rotary_positional_embedding.1} parent=35 // pred_fallthru
        _
      // Predicated region
      $region45: #{rotary_positional_embedding.1} parent=35 // pred_check
        %p773 = pneg %p197
      $region46: #{rotary_positional_embedding.1} parent=35 // pred_check_branch
        %775 = sbr.rel (%p773) target = $region48
      $region47: #{rotary_positional_embedding.1} parent=35 // pred_region
        %s776 = smul.u32 4, %s24
      $region48: #{rotary_positional_embedding.1} parent=35 // pred_fallthru
        _
    $region36: #{rotary_positional_embedding.1} parent=5 // pred_fallthru
      _
    %p777 = scmp.le.s32.totalorder 2, %s12
    // Predicated region
    $region49: #{rotary_positional_embedding.1} parent=5 // pred_check
      %p778 = pneg %p777
    $region50: #{rotary_positional_embedding.1} parent=5 // pred_check_branch
      %780 = sbr.rel (%p778) target = $region52
    $region51: #{rotary_positional_embedding.1} parent=5 // pred_region
      %s781 = ssub.s32 %s12, 2
      // Predicated region
      $region53: #{rotary_positional_embedding.1} parent=51 // pred_check
        %p782 = pneg %p173
      $region54: #{rotary_positional_embedding.1} parent=51 // pred_check_branch
        %784 = sbr.rel (%p782) target = $region56
      $region55: #{rotary_positional_embedding.1} parent=51 // pred_region
        %s785 = smul.u32 4, %s27
        %p786 = scmp.lt.s32.totalorder %s25, 1
        %s787 = scalar_select %p786, %s25, 1
        %p788 = scmp.lt.s32.totalorder %s785, 3
        %s789 = scalar_select %p788, %s785, 3
        %p790 = scmp.lt.s32.totalorder %s26, 0
        %s791 = scalar_select %p790, %s26, 0
        %s792 = sadd.s32 %s791, %s789
        %s793 = smul.addr %s787, 4
        %s794 = sadd.s32 %s792, %s793
        %s795 = smul.addr %s794, 4
        %s796 = scalar_lea.vmem %s4, %s795
      $region56: #{rotary_positional_embedding.1} parent=51 // pred_fallthru
        _
      // Predicated region
      $region57: #{rotary_positional_embedding.1} parent=51 // pred_check
        %p797 = pneg %p203
      $region58: #{rotary_positional_embedding.1} parent=51 // pred_check_branch
        %799 = sbr.rel (%p797) target = $region60
      $region59: #{rotary_positional_embedding.1} parent=51 // pred_region
        %s800 = smul.u32 4, %s27
        %p801 = scmp.lt.s32.totalorder %s25, 1
        %s802 = scalar_select %p801, %s25, 1
        %p803 = scmp.lt.s32.totalorder %s800, 3
        %s804 = scalar_select %p803, %s800, 3
        %p805 = scmp.lt.s32.totalorder %s26, 0
        %s806 = scalar_select %p805, %s26, 0
        %s807 = sadd.s32 %s806, %s804
        %s808 = smul.addr %s802, 4
        %s809 = sadd.s32 %s807, %s808
        %s810 = smul.addr %s809, 4
        %s811 = scalar_lea.vmem %s5, %s810
      $region60: #{rotary_positional_embedding.1} parent=51 // pred_fallthru
        _
    $region52: #{rotary_positional_embedding.1} parent=5 // pred_fallthru
      _
  $region6: #{rotary_positional_embedding.1} parent=0 // loop_footer
    %s16 = sadd.s32 1, %s12
  $region7: #{rotary_positional_embedding.1} parent=0 // loop_footer_branch
    %11 = sbr.rel target = $region3
  $region8: #{rotary_positional_embedding.1} parent=0 // loop_exit
    _

</llo_original>
